<compile_context>
chip_gen: v6e
topology: v6e:2x2x1
jax: 0.10.0
libtpu: 0.0.40
codegen_flags: <defaults>
</compile_context>

<pallas_src>
import functools
import math

import jax
import jax.numpy as jnp
from jax import lax
from jax.experimental import pallas as pl
from jax.experimental.pallas import tpu as pltpu


# ---------------------------------------------------------------------------
# Parameter / buffer construction (plain JAX glue, matches nn.Module.__init__)
# ---------------------------------------------------------------------------
def build_pe(max_len: int, d_model: int) -> jnp.ndarray:
    """Builds the (max_len, 1, d_model) sinusoidal positional-encoding buffer."""
    position = jnp.arange(0, max_len, dtype=jnp.float32)[:, None]          # (L, 1)
    div_term = jnp.exp(
        jnp.arange(0, d_model, 2, dtype=jnp.float32) * (-math.log(10000.0) / d_model)
    )                                                                       # (D/2,)
    pe = jnp.zeros((max_len, d_model), dtype=jnp.float32)
    pe = pe.at[:, 0::2].set(jnp.sin(position * div_term))
    pe = pe.at[:, 1::2].set(jnp.cos(position * div_term))
    return pe[:, None, :]                                                   # (L, 1, D)


# ---------------------------------------------------------------------------
# Pallas kernels
# ---------------------------------------------------------------------------
def _pe_add_kernel(x_ref, pe_ref, o_ref, *, batch):
    # x_ref / o_ref: (ts, batch*d_model); pe_ref: (ts, d_model) in x's dtype.
    pe_vals = pe_ref[...]
    if batch > 1:
        pe_vals = jnp.tile(pe_vals, (1, batch))      # broadcast over batch, lane axis
    o_ref[...] = (x_ref[...] + pe_vals).astype(o_ref.dtype)


def _pe_add_dropout_kernel(seed_ref, x_ref, pe_ref, o_ref, *,
                           batch, row_block, keep_threshold, scale):
    # Training-mode inverted dropout.  Random bits come from a counter-based hash of
    # (seed, global_row, lane): portable (no TPU-only PRNG primitives), one full-width
    # draw per grid step, masks independent of the chosen tiling.
    pe_vals = pe_ref[...]
    if batch > 1:
        pe_vals = jnp.tile(pe_vals, (1, batch))
    y = x_ref[...] + pe_vals                                            # (ts, B*D)

    shape = y.shape
    row0 = (pl.program_id(0) * row_block).astype(jnp.uint32)
    rows = lax.broadcasted_iota(jnp.int32, shape, 0).astype(jnp.uint32) + row0
    cols = lax.broadcasted_iota(jnp.int32, shape, 1).astype(jnp.uint32)
    seed = seed_ref[0].astype(jnp.uint32)

    h = rows * jnp.uint32(0x9E3779B1)
    h = h ^ (cols * jnp.uint32(0x85EBCA77))
    h = h ^ (seed * jnp.uint32(0xC2B2AE3D) + jnp.uint32(0x27D4EB2F))
    # murmur3-style avalanche finalizer (bijective, decorrelates nearby indices)
    h = h ^ (h >> 16)
    h = h * jnp.uint32(0x7FEB352D)
    h = h ^ (h >> 15)
    h = h * jnp.uint32(0x846CA68B)
    h = h ^ (h >> 16)

    # keep iff bits >= round(p * 2^32)  =>  P(keep) = 1 - p  (uint32 compare only).
    keep = h >= jnp.uint32(keep_threshold)
    o_ref[...] = jnp.where(keep, y * scale, 0.0).astype(o_ref.dtype)


# ---------------------------------------------------------------------------
# Wrapper
# ---------------------------------------------------------------------------
def _sublane_pack(dtype) -> int:
    return {4: 8, 2: 16, 1: 32}.get(jnp.dtype(dtype).itemsize, 8)


def positional_encoding(
    x: jnp.ndarray,
    pe: jnp.ndarray,
    *,
    dropout_p: float = 0.1,
    training: bool = False,
    seed: int = 0,
    target_block_bytes: int = 4 * 1024 * 1024,
    vmem_budget_bytes: int = 24 * 1024 * 1024,   # v7x-safe (64 MiB VMEM / 32 scoped)
) -> jnp.ndarray:
    """x: (S, B, D); pe: (max_len, 1, D). Returns (S, B, D).

    `seed` should be threaded per training step by the caller; the in-kernel hash
    mixes it non-linearly with the element index so masks differ across steps/tiles.
    """
    S, B, D = x.shape
    L = pe.shape[0]
    assert L >= S and pe.shape[1] == 1 and pe.shape[2] == D

    # Lane/sublane-dense 2-D views (free reshapes for row-major layouts):
    # rows = sequence positions (sublanes), lanes = batch*d_model.
    x2 = x.reshape(S, B * D)
    pe2 = pe.reshape(L, D).astype(x.dtype)     # DMA pe in x's dtype

    itemsize = jnp.dtype(x.dtype).itemsize
    pack = _sublane_pack(x.dtype)
    row_bytes = B * D * itemsize

    def working_set(ts_):
        xblk = ts_ * B * D * itemsize          # one x block (== one out block)
        peblk = ts_ * D * itemsize
        temps = 4 * ts_ * B * D * 4            # full-width temporaries (y, hash, ...)
        return 2 * (2 * xblk) + 2 * peblk + temps   # double-buffered in/out + pe

    # Byte-targeted row tile, clamped so the double-buffered working set fits VMEM.
    ts = max(pack, target_block_bytes // max(row_bytes, 1))
    while ts > pack and working_set(ts) > vmem_budget_bytes:
        ts //= 2
    if ts >= S:
        ts = S                                  # single full-extent block
    else:
        ts = max(pack, (ts // pack) * pack)     # sublane-packing aligned
    # TODO(synk): if even a `pack`-row block exceeds the VMEM budget (extremely wide
    # B*D), a second lane-splitting grid axis would be needed; not implemented here.

    # pe block's sublane dim must be a multiple of the packing or equal its full
    # extent; slice pe when ts == S is unaligned so the block covers the whole array.
    pe_in = pe2 if (ts % pack == 0) else pe2[:S]

    grid = (pl.cdiv(S, ts),)
    out_shape = jax.ShapeDtypeStruct((S, B * D), x.dtype)
    vmem_limit = int(min(64 << 20, max(32 << 20, working_set(ts) + (8 << 20))))
    compiler_params = pltpu.CompilerParams(
        dimension_semantics=("parallel",),
        vmem_limit_bytes=vmem_limit,
    )

    if (not training) or dropout_p == 0.0:
        kernel = functools.partial(_pe_add_kernel, batch=B)
        out2 = pl.pallas_call(
            kernel,
            out_shape=out_shape,
            grid_spec=pltpu.PrefetchScalarGridSpec(
                num_scalar_prefetch=0,
                grid=grid,
                in_specs=[
                    pl.BlockSpec((ts, B * D), lambda i: (i, 0)),
                    pl.BlockSpec((ts, D), lambda i: (i, 0)),
                ],
                out_specs=pl.BlockSpec((ts, B * D), lambda i: (i, 0)),
            ),
            compiler_params=compiler_params,
        )(x2, pe_in)
        return out2.reshape(S, B, D)

    if dropout_p >= 1.0:
        return jnp.zeros_like(x)

    keep_threshold = min(int(round(float(dropout_p) * (1 << 32))), (1 << 32) - 1)
    scale = 1.0 / (1.0 - float(dropout_p))
    kernel = functools.partial(
        _pe_add_dropout_kernel, batch=B, row_block=ts,
        keep_threshold=keep_threshold, scale=scale)
    seed_arr = jnp.asarray([seed], dtype=jnp.int32)
    out2 = pl.pallas_call(
        kernel,
        out_shape=out_shape,
        grid_spec=pltpu.PrefetchScalarGridSpec(
            num_scalar_prefetch=1,
            grid=grid,
            in_specs=[
                pl.BlockSpec((ts, B * D), lambda i, seed_ref: (i, 0)),
                pl.BlockSpec((ts, D), lambda i, seed_ref: (i, 0)),
            ],
            out_specs=pl.BlockSpec((ts, B * D), lambda i, seed_ref: (i, 0)),
        ),
        compiler_params=compiler_params,
    )(seed_arr, x2, pe_in)
    return out2.reshape(S, B, D)


# ---------------------------------------------------------------------------
# Main
# ---------------------------------------------------------------------------
if __name__ == "__main__":
    d_model = 32
    max_len = 64   # small synthetic max_len (module default 5000; only pe[:S] is used)
    seq_len = 8
    batch = 2

    key = jax.random.PRNGKey(0)
    x = jax.random.normal(key, (seq_len, batch, d_model), dtype=jnp.float32)
    pe = build_pe(max_len, d_model)

    # Eval-mode forward (dropout == identity), exact semantics of module.eval().
    y = positional_encoding(x, pe, dropout_p=0.1, training=False)
    y = jax.block_until_ready(y)
    y_ref = x + pe[:seq_len]
    assert y.shape == (seq_len, batch, d_model)
    assert jnp.allclose(y, y_ref, atol=1e-6, rtol=1e-6), "eval mismatch vs reference"

    # Training-mode forward: inverted dropout. Every output element must be either
    # exactly 0 (dropped) or (x + pe) / (1 - p) (kept).
    p = 0.5
    y_tr = jax.block_until_ready(
        positional_encoding(x, pe, dropout_p=p, training=True, seed=123))
    scaled = y_ref / (1.0 - p)
    dropped = (y_tr == 0.0)
    kept_ok = jnp.isclose(y_tr, scaled, atol=1e-5, rtol=1e-5)
    assert y_tr.shape == (seq_len, batch, d_model)
    assert bool(jnp.all(dropped | kept_ok)), "dropout values inconsistent"
    keep_frac = float(jnp.mean(1.0 - dropped.astype(jnp.float32)))
    assert 0.0 < keep_frac < 1.0, "dropout mask degenerate"

    # TODO(synk): dropout cannot bit-match torch's RNG; statistics (P(keep)=1-p,
    # 1/(1-p) scale) match.  On real TPU hardware the hash could be swapped for
    # pltpu.prng_random_bits, but that primitive has no CPU/interpret lowering.

    print("KERNEL_OK")
</pallas_src>

<mosaic_0001>
module attributes {stable_mosaic.version = 11 : i64} {
  func.func @_pe_add_kernel(%arg0: i32, %arg1: memref<8x64xf32, #tpu.memory_space<vmem>>, %arg2: memref<8x32xf32, #tpu.memory_space<vmem>>, %arg3: memref<8x64xf32, #tpu.memory_space<vmem>>) attributes {dimension_semantics = [#tpu.dimension_semantics<parallel>], iteration_bounds = array<i64: 1>, scalar_prefetch = 0 : i64, scratch_operands = 0 : i64, tpu.core_type = #tpu.core_type<tc>, window_params = [{transform_indices = @transform_0, window_bounds = array<i64: 8, 64>}, {transform_indices = @transform_1, window_bounds = array<i64: 8, 32>}, {transform_indices = @transform_2, window_bounds = array<i64: 8, 64>}]} {
    %c0 = arith.constant 0 : index
    %c0_0 = arith.constant 0 : index
    %0 = vector.load %arg2[%c0, %c0_0] : memref<8x32xf32, #tpu.memory_space<vmem>>, vector<8x32xf32>
    %1 = tpu.concatenate %0, %0 in 1 : vector<8x32xf32>, vector<8x32xf32> -> vector<8x64xf32>
    %c0_1 = arith.constant 0 : index
    %c0_2 = arith.constant 0 : index
    %2 = vector.load %arg1[%c0_1, %c0_2] : memref<8x64xf32, #tpu.memory_space<vmem>>, vector<8x64xf32>
    %3 = arith.addf %2, %1 : vector<8x64xf32>
    %c0_3 = arith.constant 0 : index
    %c0_4 = arith.constant 0 : index
    %4 = vector.load %arg3[%c0_3, %c0_4] : memref<8x64xf32, #tpu.memory_space<vmem>>, vector<8x64xf32>
    tpu.vector_store %arg3[%c0_3, %c0_4], %3 {strides = array<i32>} : memref<8x64xf32, #tpu.memory_space<vmem>>, vector<8x64xf32>,
    return
  }
  func.func @transform_0(%arg0: i32) -> (i32, i32) {
    %c0_i32 = arith.constant 0 : i32
    %c0_i32_0 = arith.constant 0 : i32
    return %arg0, %c0_i32 : i32, i32
  }
  func.func @transform_1(%arg0: i32) -> (i32, i32) {
    %c0_i32 = arith.constant 0 : i32
    %c0_i32_0 = arith.constant 0 : i32
    return %arg0, %c0_i32 : i32, i32
  }
  func.func @transform_2(%arg0: i32) -> (i32, i32) {
    %c0_i32 = arith.constant 0 : i32
    %c0_i32_0 = arith.constant 0 : i32
    return %arg0, %c0_i32 : i32, i32
  }
}

</mosaic_0001>

<llo_original>
// kernel: tpu_custom_call.1
$region0: #{tpu_custom_call.1}
  #allocation0 [shape = 'u32[]', space=smem, size = 0x4, offset = 0x4, fixed_abs, tag = 'smem constant byte address 0x4 - core index']
  #allocation1 [shape = 'u32[144,128]{1,0:T(1,128)}', space=vmem, size = 0x12000, scoped, tag = 'internal scratch']
  %s0 = inlined_call_operand.vmem [shape: f32[8,64], index: 0, kind: input, shape index: {}]
  %s1 = inlined_call_operand.vmem [shape: f32[64,32], index: 1, kind: input, shape index: {}]
  %s2 = inlined_call_operand.hbm [shape: f32[8,64], index: 2, kind: output, shape index: {}]
  %s3 = sld [smem:[#allocation0]]
  $region18: #{tpu_custom_call.1} parent=0
    _
  %s5 = ssub.s32 1, %s3
  %s6 = scalar_select 0, %s5, %s3
  $region1: #{tpu_custom_call.1} parent=0
    #allocation2 [shape = 'u8[4096]{0}', space=vmem, size = 0x1000, scoped, tag = 'output window, operand 0, single buffered']
    #allocation3 [shape = 's32[1]{0}', space=sflag, size = 0x4, scoped, tag = 'scoped memory for tpu_custom_call.1']
    %7 = vsyncpa [#allocation3], 0
    // Predicated region
    $region2: #{tpu_custom_call.1} parent=1 // pred_check
      _
    $region3: #{tpu_custom_call.1} parent=1 // pred_check_branch
      %9 = sbr.rel (0) target = $region5
    $region4: #{tpu_custom_call.1} parent=1 // pred_region
      _
    $region5: #{tpu_custom_call.1} parent=1 // pred_fallthru
      _
    // Predicated region
    $region6: #{tpu_custom_call.1} parent=1 // pred_check
      _
    $region7: #{tpu_custom_call.1} parent=1 // pred_check_branch
      %11 = sbr.rel (0) target = $region9
    $region8: #{tpu_custom_call.1} parent=1 // pred_region
      _
    $region9: #{tpu_custom_call.1} parent=1 // pred_fallthru
      _
    %v12 = vld [vmem:[%s1] sm:$0xff]
    %14 = vrot.lane.b32.xlu0 %v12, 32
    %v15 = vpop.permute.xlu0 %14
    %vm17 = vcmask 261120
    %v18 = vsel %vm17, %v12, %v15
    %v19 = vld [vmem:[%s0] sm:$0xff]
    %v20 = vadd.f32 %v19, %v18
    %vm21 = vcmask 523264
    %22 = vst.msk [vmem:[#allocation2] sm:$0xff] %vm21, %v20
    // Predicated region
    $region10: #{tpu_custom_call.1} parent=1 // pred_check
      _
    $region11: #{tpu_custom_call.1} parent=1 // pred_check_branch
      %24 = sbr.rel (0) target = $region13
    $region12: #{tpu_custom_call.1} parent=1 // pred_region
      %s26 = ssub.s32 128, 128
      %27 = vsyncadd [#allocation3], %s26
      %s29 = sshll.u32 [#allocation2], 4
      %s30 = int_to_ptr.vmem [resolvable:$true] %s29
      %32 = dma.vmem_to_hbm [thread:$0]  %s30, 128, %s2, [#allocation3]
    $region13: #{tpu_custom_call.1} parent=1 // pred_fallthru
      _
    // Predicated region
    $region14: #{tpu_custom_call.1} parent=1 // pred_check
      _
    $region15: #{tpu_custom_call.1} parent=1 // pred_check_branch
      %34 = sbr.rel (0) target = $region17
    $region16: #{tpu_custom_call.1} parent=1 // pred_region
      %35 = dma.done [#allocation3], 128
    $region17: #{tpu_custom_call.1} parent=1 // pred_fallthru
      _
    %36 = vsyncpa [#allocation3], 1

</llo_original>
